<compile_context>
chip_gen: v6e
topology: v6e:2x2x1
jax: 0.10.0
libtpu: 0.0.40
codegen_flags: <defaults>
</compile_context>

<pallas_src>
import functools

import jax
import jax.numpy as jnp
from jax import lax
from jax.experimental import pallas as pl
from jax.experimental.pallas import tpu as pltpu

_LANES = 128
_STRIP = 512  # rows per inner compute strip (512 x 128 x 4B = 256 KiB)


# --------------------------------------------------------------------------
# Kernel
# --------------------------------------------------------------------------
def _mish_math(x, do_nr):
    """mish(x) computed in f32 with a single exp (numerically stable).

      t = exp(-|x|) in (0, 1]
      x >= 0 : tanh(softplus(x)) = (1 + 2t)   / (1 + 2t + 2t^2)
      x <  0 : tanh(softplus(x)) = (2t + t^2) / (2 + 2t + t^2)
    """
    x = x.astype(jnp.float32)
    t = jnp.exp(-jnp.abs(x))          # EUP
    t2 = t * t
    two_t = t + t
    two_t2 = t2 + t2
    pos = x >= 0.0
    num_p = 1.0 + two_t
    num_n = two_t + t2
    num = jnp.where(pos, num_p, num_n)
    den = jnp.where(pos, num_p + two_t2, num_n + 2.0)   # den in [1, 5]
    r = pl.reciprocal(den, approx=True)                 # EUP
    if do_nr:
        # One Newton-Raphson step (2 VPU ops) restores ~f32 accuracy; skipped
        # for 16-bit outputs where approx vrcp error is already below 1 ulp.
        r = r * (2.0 - den * r)
    return x * num * r


def _mish_kernel(x_ref, o_ref, *, do_nr):
    rows = x_ref.shape[0]
    out_dt = o_ref.dtype

    if rows <= 2 * _STRIP:
        # Small block: evaluate in one shot.
        o_ref[...] = _mish_math(x_ref[...], do_nr).astype(out_dt)
        return

    # Large block: stream it in fixed 512-row strips so intermediates
    # (t, t2, num, den, r) live in vregs, not block-sized VMEM temporaries.
    n_full = rows // _STRIP
    rem = rows - n_full * _STRIP

    def body(i, carry):
        r0 = pl.multiple_of(i * _STRIP, _STRIP)
        xs = x_ref[pl.ds(r0, _STRIP), :]
        o_ref[pl.ds(r0, _STRIP), :] = _mish_math(xs, do_nr).astype(out_dt)
        return carry

    lax.fori_loop(0, n_full, body, 0)

    if rem:
        r0 = n_full * _STRIP
        xs = x_ref[pl.ds(r0, rem), :]
        o_ref[pl.ds(r0, rem), :] = _mish_math(xs, do_nr).astype(out_dt)


# --------------------------------------------------------------------------
# Host-side configuration
# --------------------------------------------------------------------------
def _tpu_config():
    """(block_bytes, min_grid_steps, vmem_limit_bytes) for the local TPU gen."""
    kind = ""
    try:
        kind = jax.devices()[0].device_kind.lower()
    except Exception:  # pragma: no cover - defensive
        pass
    if "v7" in kind or "tpu7" in kind:
        # 8 MiB blocks => ~32 MiB double-buffered in+out; raise scoped VMEM.
        return 8 * 1024 * 1024, 8, 48 * 1024 * 1024
    if "v6" in kind:
        # 4 MiB blocks => 16 MiB resident, fits the 32 MiB default.
        return 4 * 1024 * 1024, 2, None
    # v5e / unknown: 2 MiB blocks => 8 MiB resident, fits the 16 MiB default.
    return 2 * 1024 * 1024, 2, None


def _choose_block_rows(rows: int, block_bytes: int, itemsize: int,
                       min_steps: int) -> int:
    """Pick block rows: constant bytes per block, capped for VMEM/grid width."""
    # dtype-aware: same byte-sized DMA block for f32 / bf16 / int8.
    requested = max(256, (block_bytes // (_LANES * itemsize) // 32) * 32)
    if rows <= requested:
        if rows <= 2 * _STRIP:
            return rows                      # single full-extent block
        # Give the grid `min_steps` blocks (v7x 2-TC sharding / DMA overlap),
        # but never shrink below one strip.
        br = -(-rows // min_steps)           # ceil
        br = max(_STRIP, ((br + 31) // 32) * 32)
        return min(br, rows)
    br = requested
    floor = max(2 * _STRIP, requested // 8)
    while br > floor and pl.cdiv(rows, br) < min_steps:
        br //= 2
    return br


def _mish_2d(x2d: jax.Array, block_rows: int, vmem_limit) -> jax.Array:
    rows, lanes = x2d.shape
    do_nr = jnp.dtype(x2d.dtype).itemsize >= 4   # keep NR for f32 outputs
    kernel = functools.partial(_mish_kernel, do_nr=do_nr)
    params = dict(dimension_semantics=("parallel",))
    if vmem_limit is not None:
        params["vmem_limit_bytes"] = vmem_limit
    return pl.pallas_call(
        kernel,
        out_shape=jax.ShapeDtypeStruct((rows, lanes), x2d.dtype),
        grid=(pl.cdiv(rows, block_rows),),
        in_specs=[pl.BlockSpec((block_rows, lanes), lambda i: (i, 0))],
        out_specs=pl.BlockSpec((block_rows, lanes), lambda i: (i, 0)),
        compiler_params=pltpu.CompilerParams(**params),
    )(x2d)


def _mish_jnp(x: jax.Array) -> jax.Array:
    """Plain-jnp fallback for tiny tails (< 128 elements)."""
    xf = x.astype(jnp.float32)
    return (xf * jnp.tanh(jax.nn.softplus(xf))).astype(x.dtype)


@functools.partial(jax.jit, static_argnames=("block_bytes",))
def mish(x: jax.Array, *, block_bytes: int | None = None) -> jax.Array:
    """Elementwise Mish via a Pallas TPU kernel. Works for any shape/dtype."""
    orig_shape = x.shape
    n = x.size
    if n == 0:
        return x

    cfg_bytes, min_steps, vmem_limit = _tpu_config()
    if block_bytes is not None:
        cfg_bytes = block_bytes
    itemsize = jnp.dtype(x.dtype).itemsize

    flat = x.reshape(-1)
    n_main = (n // _LANES) * _LANES
    if n_main == 0:
        # Fewer than 128 elements total: not worth a kernel launch.
        return _mish_jnp(flat).reshape(orig_shape)

    rows = n_main // _LANES
    br = _choose_block_rows(rows, cfg_bytes, itemsize, min_steps)
    main = _mish_2d(flat[:n_main].reshape(rows, _LANES), br, vmem_limit)
    main = main.reshape(-1)

    if n_main == n:
        # Fast path: no pad, no slice, no concat (common for CNN feature maps).
        return main.reshape(orig_shape)

    # Ragged path: <=127-element tail handled in plain jnp and stitched on,
    # avoiding the full-array pad + post-slice HBM passes.
    tail = _mish_jnp(flat[n_main:])
    return jnp.concatenate([main, tail]).reshape(orig_shape)


def mish_reference(x: jax.Array) -> jax.Array:
    xf = x.astype(jnp.float32)
    return (xf * jnp.tanh(jax.nn.softplus(xf))).astype(x.dtype)


if __name__ == "__main__":
    key = jax.random.PRNGKey(0)
    # NCHW input, matching the PyTorch convention of the surrounding model.
    x = jax.random.normal(key, (2, 4, 16, 16), dtype=jnp.float32) * 3.0

    y = mish(x)
    jax.block_until_ready(y)

    y_ref = mish_reference(x)
    assert y.shape == x.shape and y.dtype == x.dtype
    assert jnp.allclose(y, y_ref, atol=1e-4, rtol=1e-4)

    # Ragged (numel % 128 != 0) path: kernel on aligned prefix + jnp tail.
    x2 = jax.random.normal(jax.random.PRNGKey(1), (3, 5, 7, 11), dtype=jnp.float32) * 3.0
    y2 = mish(x2)
    jax.block_until_ready(y2)
    assert jnp.allclose(y2, mish_reference(x2), atol=1e-4, rtol=1e-4)

    # bf16 path: dtype-aware blocks + NR-free approx reciprocal.
    x3 = (jax.random.normal(jax.random.PRNGKey(2), (2, 4, 16, 16)) * 3.0).astype(jnp.bfloat16)
    y3 = mish(x3)
    jax.block_until_ready(y3)
    assert y3.dtype == jnp.bfloat16
    assert jnp.allclose(y3.astype(jnp.float32),
                        mish_reference(x3).astype(jnp.float32),
                        atol=2e-2, rtol=2e-2)

    print("KERNEL_OK")
</pallas_src>

<mosaic_0001>
module attributes {stable_mosaic.version = 11 : i64} {
  func.func @_mish_kernel(%arg0: i32, %arg1: memref<16x128xf32, #tpu.memory_space<vmem>>, %arg2: memref<16x128xf32, #tpu.memory_space<vmem>>) attributes {dimension_semantics = [#tpu.dimension_semantics<parallel>], iteration_bounds = array<i64: 1>, scalar_prefetch = 0 : i64, scratch_operands = 0 : i64, tpu.core_type = #tpu.core_type<tc>, window_params = [{transform_indices = @transform_0, window_bounds = array<i64: 16, 128>}, {transform_indices = @transform_1, window_bounds = array<i64: 16, 128>}]} {
    %c0 = arith.constant 0 : index
    %c0_0 = arith.constant 0 : index
    %0 = vector.load %arg1[%c0, %c0_0] : memref<16x128xf32, #tpu.memory_space<vmem>>, vector<16x128xf32>
    %1 = math.absf %0 : vector<16x128xf32>
    %cst = arith.constant 0.000000e+00 : f32
    %2 = vector.broadcast %cst : f32 to vector<16x128xf32>
    %3 = arith.subf %2, %1 : vector<16x128xf32>
    %4 = math.exp %3 : vector<16x128xf32>
    %5 = arith.mulf %4, %4 : vector<16x128xf32>
    %6 = arith.addf %4, %4 : vector<16x128xf32>
    %7 = arith.addf %5, %5 : vector<16x128xf32>
    %cst_1 = arith.constant 0.000000e+00 : f32
    %8 = vector.broadcast %cst_1 : f32 to vector<16x128xf32>
    %9 = arith.cmpf oge, %0, %8 : vector<16x128xf32>
    %cst_2 = arith.constant 1.000000e+00 : f32
    %10 = vector.broadcast %cst_2 : f32 to vector<16x128xf32>
    %11 = arith.addf %10, %6 : vector<16x128xf32>
    %12 = arith.addf %6, %5 : vector<16x128xf32>
    %13 = arith.select %9, %11, %12 : vector<16x128xi1>, vector<16x128xf32>
    %14 = arith.addf %11, %7 : vector<16x128xf32>
    %cst_3 = arith.constant 2.000000e+00 : f32
    %15 = vector.broadcast %cst_3 : f32 to vector<16x128xf32>
    %16 = arith.addf %12, %15 : vector<16x128xf32>
    %17 = arith.select %9, %14, %16 : vector<16x128xi1>, vector<16x128xf32>
    %18 = tpu.reciprocal %17 {approx = true} : vector<16x128xf32> -> vector<16x128xf32>
    %19 = arith.mulf %17, %18 : vector<16x128xf32>
    %cst_4 = arith.constant 2.000000e+00 : f32
    %20 = vector.broadcast %cst_4 : f32 to vector<16x128xf32>
    %21 = arith.subf %20, %19 : vector<16x128xf32>
    %22 = arith.mulf %18, %21 : vector<16x128xf32>
    %23 = arith.mulf %0, %13 : vector<16x128xf32>
    %24 = arith.mulf %23, %22 : vector<16x128xf32>
    %c0_5 = arith.constant 0 : index
    %c0_6 = arith.constant 0 : index
    %25 = vector.load %arg2[%c0_5, %c0_6] : memref<16x128xf32, #tpu.memory_space<vmem>>, vector<16x128xf32>
    tpu.vector_store %arg2[%c0_5, %c0_6], %24 {strides = array<i32>} : memref<16x128xf32, #tpu.memory_space<vmem>>, vector<16x128xf32>,
    return
  }
  func.func @transform_0(%arg0: i32) -> (i32, i32) {
    %c0_i32 = arith.constant 0 : i32
    %c0_i32_0 = arith.constant 0 : i32
    return %arg0, %c0_i32 : i32, i32
  }
  func.func @transform_1(%arg0: i32) -> (i32, i32) {
    %c0_i32 = arith.constant 0 : i32
    %c0_i32_0 = arith.constant 0 : i32
    return %arg0, %c0_i32 : i32, i32
  }
}

</mosaic_0001>

<llo_original>
// kernel: mish.1
$region0: #{mish.1}
  #allocation0 [shape = 'u32[]', space=smem, size = 0x4, offset = 0x4, fixed_abs, tag = 'smem constant byte address 0x4 - core index']
  #allocation1 [shape = 'u32[144,128]{1,0:T(1,128)}', space=vmem, size = 0x12000, scoped, tag = 'internal scratch']
  %s0 = inlined_call_operand.vmem [shape: f32[16,128], index: 0, kind: input, shape index: {}]
  %s1 = inlined_call_operand.vmem [shape: f32[16,128], index: 1, kind: output, shape index: {}]
  %s2 = sld [smem:[#allocation0]]
  $region14: #{mish.1} parent=0
    _
  %s4 = ssub.s32 1, %s2
  %s5 = scalar_select 0, %s4, %s2
  // Predicated region
  $region2: #{mish.1} parent=0 // pred_check
    _
  $region3: #{mish.1} parent=0 // pred_check_branch
    %7 = sbr.rel (0) target = $region5
  $region4: #{mish.1} parent=0 // pred_region
    _
  $region5: #{mish.1} parent=0 // pred_fallthru
    _
  %v8 = vld [vmem:[%s0] sm:$0xff]
  %v9 = vld [vmem:[%s0 + $0x8] sm:$0xff]
  %v10 = vand.u32 2147483647, %v8
  %v11 = vand.u32 2147483647, %v9
  %v12 = vsub.f32 0.0, %v10
  %v13 = vsub.f32 0.0, %v11
  %v14 = vmul.f32 %v12, 1.442695
  %v15 = vpow.pop %v14
  %v16 = vmul.f32 %v13, 1.442695
  %v17 = vpow.pop %v16
  %v18 = vmul.f32 %v15, %v15
  %v19 = vmul.f32 %v17, %v17
  %v20 = vadd.f32 %v15, %v15
  %v21 = vadd.f32 %v17, %v17
  %v22 = vadd.f32 %v18, %v18
  %v23 = vadd.f32 %v19, %v19
  %vm24 = vcmp.ge.f32.partialorder %v8, 0.0
  %vm25 = vcmp.ge.f32.partialorder %v9, 0.0
  %v26 = vadd.f32 %v20, 1.0
  %v27 = vadd.f32 %v21, 1.0
  %v28 = vadd.f32 %v20, %v18
  %v29 = vadd.f32 %v21, %v19
  %v30 = vsel %vm24, %v26, %v28
  %v31 = vsel %vm25, %v27, %v29
  %v32 = vadd.f32 %v26, %v22
  %v33 = vadd.f32 %v27, %v23
  %v34 = vadd.f32 %v28, 2.0
  %v35 = vadd.f32 %v29, 2.0
  %v36 = vsel %vm24, %v32, %v34
  %v37 = vsel %vm25, %v33, %v35
  %v38 = vrcp.pop %v36
  %v39 = vrcp.pop %v37
  %v40 = vmul.f32 %v36, %v38
  %v41 = vmul.f32 %v37, %v39
  %v42 = vsub.f32 2.0, %v40
  %v43 = vsub.f32 2.0, %v41
  %v44 = vmul.f32 %v38, %v42
  %v45 = vmul.f32 %v39, %v43
  %v46 = vmul.f32 %v8, %v30
  %v47 = vmul.f32 %v9, %v31
  %v48 = vmul.f32 %v46, %v44
  %v49 = vmul.f32 %v47, %v45
  %50 = vst [vmem:[%s1] sm:$0xff] %v48
  %51 = vst [vmem:[%s1 + $0x8] sm:$0xff] %v49
  // Predicated region
  $region6: #{mish.1} parent=0 // pred_check
    _
  $region7: #{mish.1} parent=0 // pred_check_branch
    %53 = sbr.rel (0) target = $region9
  $region8: #{mish.1} parent=0 // pred_region
    _
  $region9: #{mish.1} parent=0 // pred_fallthru
    _
  // Predicated region
  $region10: #{mish.1} parent=0 // pred_check
    _
  $region11: #{mish.1} parent=0 // pred_check_branch
    %55 = sbr.rel (0) target = $region13
  $region12: #{mish.1} parent=0 // pred_region
    _
  $region13: #{mish.1} parent=0 // pred_fallthru
    _

</llo_original>
